<compile_context>
chip_gen: v7x
topology: tpu7x:2x2x1
jax: 0.10.0
libtpu: 0.0.40
codegen_flags: <defaults>
</compile_context>

<pallas_src>
import functools

import jax
import jax.numpy as jnp
from jax import lax
from jax.experimental import pallas as pl
from jax.experimental.pallas import tpu as pltpu

LOSS_AMP_CONST = 4.0   # amplification_constant default in cosine_sim_loss / module
_NORM_EPS_SQ = 1e-24   # F.normalize eps=1e-12, applied to the squared norm


def _round_up(x, m):
    return (x + m - 1) // m * m


# ----------------------------- fused pair-loss kernel ------------------------

def _pair_tile_kernel(bi_ref, bj_ref,                 # scalar-prefetch (SMEM)
                      emb_row_ref, emb_col_ref, tgt_ref,   # tensor inputs (VMEM)
                      out_ref,                        # per-core partial sum (VMEM)
                      acc_ref,                        # resident accumulator scratch
                      *, blk, n_valid, n_tiles, tiles_per_core,
                      mxu_dtype, lane_reduce):
    c = pl.program_id(0)          # core-split axis ("parallel")
    t = pl.program_id(1)          # tile axis within this core ("arbitrary")

    @pl.when(t == 0)
    def _():
        acc_ref[...] = jnp.zeros_like(acc_ref)

    flat = c * tiles_per_core + t
    bi = bi_ref[flat]
    bj = bj_ref[flat]

    # --- fused stage 1: normalize both blocks in f32 (rsqrt -> EUP), then cast
    # to the MXU feed dtype.  Redundant per-tile normalization is pure VPU/EUP
    # work hidden under the MXU / DMA slack.
    def _normalize(ref):
        e = ref[...].astype(jnp.float32)
        sumsq = jnp.sum(e * e, axis=-1, keepdims=True)
        inv = lax.rsqrt(jnp.maximum(sumsq, _NORM_EPS_SQ))   # == 1/max(||x||, 1e-12)
        return (e * inv).astype(mxu_dtype)

    row = _normalize(emb_row_ref)
    col = _normalize(emb_col_ref)

    # sim[u, v] = <e_u, e_v>; contract over the RHS minor dim so no per-tile
    # transpose of the col block should be needed.
    # TODO(synk): audit pl.lower_as_mlir for a vxpose here; if present, keep a
    # one-time transposed (d, N) copy instead (review item 10).
    sim = lax.dot_general(row, col,
                          dimension_numbers=(((1,), (1,)), ((), ())),
                          preferred_element_type=jnp.float32)

    diff = sim - tgt_ref[...].astype(jnp.float32)
    sq = diff * diff   # abs is redundant before squaring; amp**2 / num_pairs folded in later

    # --- single branchless mask: strict upper triangle of the GLOBAL matrix,
    # restricted to the true (unpadded) N, and zeroed for padded dummy tiles.
    grow = bi * blk + lax.broadcasted_iota(jnp.int32, sq.shape, 0)
    gcol = bj * blk + lax.broadcasted_iota(jnp.int32, sq.shape, 1)
    valid_tile = flat < n_tiles                     # dummy tiles pad the 2-core split
    mask = (gcol > grow) & (gcol < n_valid) & valid_tile
    contrib = jnp.where(mask, sq, 0.0)              # masks any ragged-edge garbage too

    if lane_reduce:
        # small-d / ld-st-bound regime: reduce across lanes on the XLU and keep
        # only a (blk, 1) resident accumulator.
        acc_ref[...] += jnp.sum(contrib, axis=-1, keepdims=True)
    else:
        acc_ref[...] += contrib

    @pl.when(t == pl.num_programs(1) - 1)
    def _():
        total = jnp.sum(acc_ref[...])
        # lane-dense (1, 8, 128) partial-sum tile; wrapper reads [c, 0, 0].
        out_ref[...] = jnp.broadcast_to(total, out_ref.shape).astype(out_ref.dtype)


# --------------------------------- wrapper -----------------------------------

def graph_distance_loss(embeddings, target_sim, *,
                        amplification_constant=LOSS_AMP_CONST,
                        block_size=512,          # v6e/v7x default; 256 also fine on v5e
                        mxu_dtype=jnp.bfloat16,
                        num_cores=2,             # v7x megacore split; harmless on 1-TC chips
                        vmem_cap_bytes=32 * 1024 * 1024):
    """embeddings: (N, D) float, target_sim: (N, N) float -> scalar loss."""
    n, d = embeddings.shape
    if n < 2:
        raise ValueError("graph_distance_loss needs at least 2 texts (N >= 2).")
    assert target_sim.shape == (n, n), "target_sim must be (N, N)"
    assert block_size % 128 == 0, "block_size must be a multiple of 128"

    # --- pick tile size: as large as allowed, shrunk to respect the VMEM cap
    # (32 MiB is safe on v5e/v6e 128 MiB and v7x 64 MiB physical VMEM).
    blk = min(block_size, _round_up(n, 128))
    lane_reduce = d < 256

    def _vmem_bytes(b):
        emb_blk = 2 * 2 * b * d * embeddings.dtype.itemsize      # row+col, double buffered
        tgt_blk = 2 * b * b * target_sim.dtype.itemsize          # target tile, double buffered
        acc = (b * 4) if lane_reduce else (b * b * 4)
        out = 8 * 128 * 4
        return emb_blk + tgt_blk + acc + out

    while blk > 128 and _vmem_bytes(blk) > int(0.75 * vmem_cap_bytes):
        blk -= 128

    # --- inputs: no large padded copies.  Only the degenerate "everything fits
    # in one partial tile" case (n < blk, i.e. n < block_size) pads to a single
    # block (at most block_size^2 floats, a one-time negligible copy).  For
    # n >= blk the arrays are passed unpadded; ragged edge tiles are masked
    # in-kernel against the true n.
    if n < blk:
        emb_in = jnp.zeros((blk, d), embeddings.dtype).at[:n, :].set(embeddings)
        tgt_in = jnp.zeros((blk, blk), target_sim.dtype).at[:n, :n].set(target_sim)
    else:
        emb_in = embeddings
        tgt_in = target_sim

    nb = -(-n // blk)                      # number of row/col blocks covering the N texts

    # Upper-triangular tile schedule (block j >= block i), split across cores.
    tiles = [(i, j) for i in range(nb) for j in range(i, nb)]
    n_tiles = len(tiles)
    ncores = min(num_cores, n_tiles)
    tiles_per_core = -(-n_tiles // ncores)
    total_slots = ncores * tiles_per_core
    bi = jnp.asarray([tiles[k][0] if k < n_tiles else 0 for k in range(total_slots)],
                     dtype=jnp.int32)
    bj = jnp.asarray([tiles[k][1] if k < n_tiles else 0 for k in range(total_slots)],
                     dtype=jnp.int32)

    tpc = tiles_per_core
    def row_map(c, t, bi_r, bj_r): return (bi_r[c * tpc + t], 0)
    def col_map(c, t, bi_r, bj_r): return (bj_r[c * tpc + t], 0)
    def tgt_map(c, t, bi_r, bj_r): return (bi_r[c * tpc + t], bj_r[c * tpc + t])
    def out_map(c, t, bi_r, bj_r): return (c, 0, 0)

    acc_shape = (blk, 1) if lane_reduce else (blk, blk)

    kernel = functools.partial(
        _pair_tile_kernel,
        blk=blk, n_valid=n, n_tiles=n_tiles, tiles_per_core=tiles_per_core,
        mxu_dtype=mxu_dtype, lane_reduce=lane_reduce)

    grid_spec = pltpu.PrefetchScalarGridSpec(
        num_scalar_prefetch=2,
        grid=(ncores, tiles_per_core),
        in_specs=[
            pl.BlockSpec((blk, d), row_map),       # row embedding block (raw, unnormalized)
            pl.BlockSpec((blk, d), col_map),       # col embedding block (raw, unnormalized)
            # NOTE: if profiling shows exposed DMA at row-strip boundaries, add
            # pipeline_mode=pl.Buffered(3) to this target-tile spec (review item 8).
            pl.BlockSpec((blk, blk), tgt_map),     # target-similarity tile
        ],
        out_specs=pl.BlockSpec((1, 8, 128), out_map),   # lane-dense per-core partial sum
        scratch_shapes=[pltpu.VMEM(acc_shape, jnp.float32)],
    )

    partials = pl.pallas_call(
        kernel,
        out_shape=jax.ShapeDtypeStruct((ncores, 8, 128), jnp.float32),
        grid_spec=grid_spec,
        compiler_params=pltpu.CompilerParams(
            # leading axis "parallel" -> sharded across the 2 TCs on v7x;
            # the resident accumulator forces "arbitrary" on the tile axis.
            dimension_semantics=("parallel", "arbitrary"),
            vmem_limit_bytes=vmem_cap_bytes),
    )(bi, bj, emb_in, emb_in, tgt_in)

    num_pairs = n * (n - 1) / 2.0
    scale = (amplification_constant * amplification_constant) / num_pairs
    return jnp.sum(partials[:, 0, 0]) * scale


# -------------------------------- reference ----------------------------------

def _reference_loss(embeddings, target_sim, amplification_constant=LOSS_AMP_CONST):
    e = embeddings.astype(jnp.float32)
    inv = lax.rsqrt(jnp.maximum(jnp.sum(e * e, axis=-1, keepdims=True), _NORM_EPS_SQ))
    en = e * inv
    sim = jnp.dot(en, en.T, precision=lax.Precision.HIGHEST)
    diff = jnp.abs(sim - target_sim.astype(jnp.float32)) * amplification_constant
    per_pair = diff ** 2
    n = e.shape[0]
    mask = jnp.triu(jnp.ones((n, n), dtype=bool), k=1)
    return jnp.sum(jnp.where(mask, per_pair, 0.0)) / (n * (n - 1) / 2.0)


if __name__ == "__main__":
    key = jax.random.PRNGKey(0)
    k_emb, k_mat, k_idx, k_emb2, k_mat2 = jax.random.split(key, 5)

    # ---- Primary case, shapes matching the module's use -----------------------
    N = 8    # number of texts in the batch
    D = 32   # embedding dim of the text encoder
    V = 16   # vocabulary size of the wordnet similarity matrix

    # Synthetic "encoder output" embeddings for the N texts.
    embeddings = jax.random.normal(k_emb, (N, D), dtype=jnp.float32)

    # Deterministic precomputed wordnet similarity matrix (symmetric, in [0, 1]).
    w = jax.random.uniform(k_mat, (V, V), dtype=jnp.float32)
    wordnet_similarity_matrix = 0.5 * (w + w.T)

    # word_index: map each of the N texts to a vocabulary index (host-side glue).
    word_idx = jax.random.permutation(k_idx, V)[:N]
    target_sim = wordnet_similarity_matrix[word_idx[:, None], word_idx[None, :]]

    ref = _reference_loss(embeddings, target_sim)

    # Default bf16 MXU feed.
    loss_bf16 = graph_distance_loss(embeddings, target_sim)
    jax.block_until_ready(loss_bf16)
    assert jnp.allclose(loss_bf16, ref, rtol=5e-2, atol=5e-2), (loss_bf16, ref)

    # f32 MXU feed vs exact f32 reference (tighter).
    loss_f32 = graph_distance_loss(embeddings, target_sim, mxu_dtype=jnp.float32)
    jax.block_until_ready(loss_f32)
    assert jnp.allclose(loss_f32, ref, rtol=1e-3, atol=1e-4), (loss_f32, ref)

    # ---- Coverage: multi-tile schedule, ragged (unpadded) edge tiles, 2-core
    # split with one padded dummy tile, lane-reduced accumulator (d < 256).
    N2, D2 = 200, 64
    emb2 = jax.random.normal(k_emb2, (N2, D2), dtype=jnp.float32)
    t2 = jax.random.uniform(k_mat2, (N2, N2), dtype=jnp.float32)
    t2 = 0.5 * (t2 + t2.T)
    loss2 = graph_distance_loss(emb2, t2, mxu_dtype=jnp.float32, block_size=128)
    jax.block_until_ready(loss2)
    ref2 = _reference_loss(emb2, t2)
    assert jnp.allclose(loss2, ref2, rtol=1e-3, atol=1e-4), (loss2, ref2)

    # ---- Coverage: full (blk, blk) accumulator path (d >= 256).
    N3, D3 = 200, 384
    emb3 = jax.random.normal(k_emb2, (N3, D3), dtype=jnp.float32)
    loss3 = graph_distance_loss(emb3, t2, mxu_dtype=jnp.float32, block_size=128)
    jax.block_until_ready(loss3)
    ref3 = _reference_loss(emb3, t2)
    assert jnp.allclose(loss3, ref3, rtol=1e-3, atol=1e-4), (loss3, ref3)

    # TODO(synk): model_to_use.encode_text / tokenizer_ (the CLIP-style text
    # encoder) is external to this loss module and has no Pallas equivalent; the
    # kernel starts from raw (unnormalized) embeddings and a gathered (N, N)
    # target-similarity matrix.
    print("KERNEL_OK")
</pallas_src>

<mosaic_0001>
module attributes {stable_mosaic.version = 11 : i64} {
  func.func @_pair_tile_kernel(%arg0: i32, %arg1: i32, %arg2: memref<1xi32, #tpu.memory_space<smem>>, %arg3: memref<1xi32, #tpu.memory_space<smem>>, %arg4: memref<128x32xf32, #tpu.memory_space<vmem>>, %arg5: memref<128x32xf32, #tpu.memory_space<vmem>>, %arg6: memref<128x128xf32, #tpu.memory_space<vmem>>, %arg7: memref<1x8x128xf32, #tpu.memory_space<vmem>>, %arg8: memref<128x1xf32, #tpu.memory_space<vmem>>) attributes {dimension_semantics = [#tpu.dimension_semantics<parallel>, #tpu.dimension_semantics<arbitrary>], iteration_bounds = array<i64: 1, 1>, scalar_prefetch = 2 : i64, scratch_operands = 1 : i64, tpu.core_type = #tpu.core_type<tc>, window_params = [{transform_indices = @transform_0, window_bounds = array<i64: 128, 32>}, {transform_indices = @transform_1, window_bounds = array<i64: 128, 32>}, {transform_indices = @transform_2, window_bounds = array<i64: 128, 128>}, {transform_indices = @transform_3, window_bounds = array<i64: 1, 8, 128>}]} {
    %c0_i32 = arith.constant 0 : i32
    %0 = arith.cmpi eq, %arg1, %c0_i32 : i32
    %1 = arith.extui %0 : i1 to i32
    %c0_i32_0 = arith.constant 0 : i32
    %2 = arith.cmpi ne, %1, %c0_i32_0 : i32
    scf.if %2 {
      %cst_20 = arith.constant 0.000000e+00 : f32
      %58 = vector.broadcast %cst_20 : f32 to vector<128x1xf32>
      %c0_21 = arith.constant 0 : index
      %c0_22 = arith.constant 0 : index
      %59 = vector.load %arg8[%c0_21, %c0_22] : memref<128x1xf32, #tpu.memory_space<vmem>>, vector<128x1xf32>
      tpu.vector_store %arg8[%c0_21, %c0_22], %58 {strides = array<i32>} : memref<128x1xf32, #tpu.memory_space<vmem>>, vector<128x1xf32>,
    } else {
    }
    %c1_i32 = arith.constant 1 : i32
    %3 = arith.muli %arg0, %c1_i32 : i32
    %4 = arith.addi %3, %arg1 : i32
    %5 = arith.index_cast %4 : i32 to index
    %6 = memref.load %arg2[%5] : memref<1xi32, #tpu.memory_space<smem>>
    %7 = arith.index_cast %4 : i32 to index
    %8 = memref.load %arg3[%7] : memref<1xi32, #tpu.memory_space<smem>>
    %c0 = arith.constant 0 : index
    %c0_1 = arith.constant 0 : index
    %9 = vector.load %arg4[%c0, %c0_1] : memref<128x32xf32, #tpu.memory_space<vmem>>, vector<128x32xf32>
    %10 = arith.mulf %9, %9 : vector<128x32xf32>
    %cst = arith.constant dense<0.000000e+00> : vector<128xf32>
    %11 = vector.multi_reduction <add>, %10, %cst [1] : vector<128x32xf32> to vector<128xf32>
    %12 = vector.shape_cast %11 : vector<128xf32> to vector<128x1xf32>
    %cst_2 = arith.constant 1.000000e-24 : f32
    %13 = vector.broadcast %cst_2 : f32 to vector<128x1xf32>
    %14 = arith.maximumf %12, %13 : vector<128x1xf32>
    %15 = math.rsqrt %14 : vector<128x1xf32>
    %16 = vector.broadcast %15 : vector<128x1xf32> to vector<128x32xf32>
    %17 = arith.mulf %9, %16 : vector<128x32xf32>
    %18 = arith.truncf %17 : vector<128x32xf32> to vector<128x32xbf16>
    %c0_3 = arith.constant 0 : index
    %c0_4 = arith.constant 0 : index
    %19 = vector.load %arg5[%c0_3, %c0_4] : memref<128x32xf32, #tpu.memory_space<vmem>>, vector<128x32xf32>
    %20 = arith.mulf %19, %19 : vector<128x32xf32>
    %cst_5 = arith.constant dense<0.000000e+00> : vector<128xf32>
    %21 = vector.multi_reduction <add>, %20, %cst_5 [1] : vector<128x32xf32> to vector<128xf32>
    %22 = vector.shape_cast %21 : vector<128xf32> to vector<128x1xf32>
    %cst_6 = arith.constant 1.000000e-24 : f32
    %23 = vector.broadcast %cst_6 : f32 to vector<128x1xf32>
    %24 = arith.maximumf %22, %23 : vector<128x1xf32>
    %25 = math.rsqrt %24 : vector<128x1xf32>
    %26 = vector.broadcast %25 : vector<128x1xf32> to vector<128x32xf32>
    %27 = arith.mulf %19, %26 : vector<128x32xf32>
    %28 = arith.truncf %27 : vector<128x32xf32> to vector<128x32xbf16>
    %cst_7 = arith.constant dense<0.000000e+00> : vector<128x128xf32>
    %29 = tpu.matmul %18, %28, %cst_7 {dimension_numbers = #tpu.dot_dimension_numbers<[1], [1], [0], [0], [0, 0, 1, 0], [], []>} : vector<128x32xbf16>, vector<128x32xbf16>, vector<128x128xf32> -> vector<128x128xf32>
    %c0_8 = arith.constant 0 : index
    %c0_9 = arith.constant 0 : index
    %30 = vector.load %arg6[%c0_8, %c0_9] : memref<128x128xf32, #tpu.memory_space<vmem>>, vector<128x128xf32>
    %31 = arith.subf %29, %30 : vector<128x128xf32>
    %32 = arith.mulf %31, %31 : vector<128x128xf32>
    %c128_i32 = arith.constant 128 : i32
    %33 = arith.muli %6, %c128_i32 : i32
    %34 = tpu.iota {dimensions = array<i32: 0>} : vector<128x128xi32>
    %35 = vector.broadcast %33 : i32 to vector<128x128xi32>
    %36 = arith.addi %35, %34 : vector<128x128xi32>
    %c128_i32_10 = arith.constant 128 : i32
    %37 = arith.muli %8, %c128_i32_10 : i32
    %38 = tpu.iota {dimensions = array<i32: 1>} : vector<128x128xi32>
    %39 = vector.broadcast %37 : i32 to vector<128x128xi32>
    %40 = arith.addi %39, %38 : vector<128x128xi32>
    %c1_i32_11 = arith.constant 1 : i32
    %41 = arith.cmpi slt, %4, %c1_i32_11 : i32
    %42 = arith.cmpi sgt, %40, %36 : vector<128x128xi32>
    %c8_i32 = arith.constant 8 : i32
    %43 = vector.broadcast %c8_i32 : i32 to vector<128x128xi32>
    %44 = arith.cmpi slt, %40, %43 : vector<128x128xi32>
    %45 = arith.andi %42, %44 : vector<128x128xi1>
    %46 = vector.broadcast %41 : i1 to vector<128x128xi1>
    %47 = arith.andi %45, %46 : vector<128x128xi1>
    %cst_12 = arith.constant 0.000000e+00 : f32
    %48 = vector.broadcast %cst_12 : f32 to vector<128x128xf32>
    %49 = arith.select %47, %32, %48 : vector<128x128xi1>, vector<128x128xf32>
    %c0_13 = arith.constant 0 : index
    %c0_14 = arith.constant 0 : index
    %50 = vector.load %arg8[%c0_13, %c0_14] : memref<128x1xf32, #tpu.memory_space<vmem>>, vector<128x1xf32>
    %cst_15 = arith.constant dense<0.000000e+00> : vector<128xf32>
    %51 = vector.multi_reduction <add>, %49, %cst_15 [1] : vector<128x128xf32> to vector<128xf32>
    %52 = vector.shape_cast %51 : vector<128xf32> to vector<128x1xf32>
    %53 = arith.addf %50, %52 : vector<128x1xf32>
    %c0_16 = arith.constant 0 : index
    %c0_17 = arith.constant 0 : index
    %54 = vector.load %arg8[%c0_16, %c0_17] : memref<128x1xf32, #tpu.memory_space<vmem>>, vector<128x1xf32>
    tpu.vector_store %arg8[%c0_16, %c0_17], %53 {strides = array<i32>} : memref<128x1xf32, #tpu.memory_space<vmem>>, vector<128x1xf32>,
    %c0_i32_18 = arith.constant 0 : i32
    %55 = arith.cmpi eq, %arg1, %c0_i32_18 : i32
    %56 = arith.extui %55 : i1 to i32
    %c0_i32_19 = arith.constant 0 : i32
    %57 = arith.cmpi ne, %56, %c0_i32_19 : i32
    scf.if %57 {
      %c0_20 = arith.constant 0 : index
      %c0_21 = arith.constant 0 : index
      %58 = vector.load %arg8[%c0_20, %c0_21] : memref<128x1xf32, #tpu.memory_space<vmem>>, vector<128x1xf32>
      %59 = vector.shape_cast %58 : vector<128x1xf32> to vector<1x128x1xf32>
      %cst_22 = arith.constant dense<0.000000e+00> : vector<1xf32>
      %60 = vector.multi_reduction <add>, %59, %cst_22 [1, 2] : vector<1x128x1xf32> to vector<1xf32>
      %61 = vector.shape_cast %60 : vector<1xf32> to vector<1x1x1xf32>
      %62 = vector.extract %61[0, 0, 0] : f32 from vector<1x1x1xf32>
      %63 = vector.broadcast %62 : f32 to vector<1x8x128xf32>
      %c0_23 = arith.constant 0 : index
      %c0_24 = arith.constant 0 : index
      %c0_25 = arith.constant 0 : index
      %64 = vector.load %arg7[%c0_23, %c0_24, %c0_25] : memref<1x8x128xf32, #tpu.memory_space<vmem>>, vector<1x8x128xf32>
      tpu.vector_store %arg7[%c0_23, %c0_24, %c0_25], %63 {strides = array<i32>} : memref<1x8x128xf32, #tpu.memory_space<vmem>>, vector<1x8x128xf32>,
    } else {
    }
    return
  }
  func.func @transform_0(%arg0: i32, %arg1: i32, %arg2: memref<1xi32, #tpu.memory_space<smem>>, %arg3: memref<1xi32, #tpu.memory_space<smem>>) -> (i32, i32) {
    %c1_i32 = arith.constant 1 : i32
    %0 = arith.muli %arg0, %c1_i32 : i32
    %1 = arith.addi %0, %arg1 : i32
    %2 = arith.index_cast %1 : i32 to index
    %3 = memref.load %arg2[%2] : memref<1xi32, #tpu.memory_space<smem>>
    %c0_i32 = arith.constant 0 : i32
    %c0_i32_0 = arith.constant 0 : i32
    return %3, %c0_i32 : i32, i32
  }
  func.func @transform_1(%arg0: i32, %arg1: i32, %arg2: memref<1xi32, #tpu.memory_space<smem>>, %arg3: memref<1xi32, #tpu.memory_space<smem>>) -> (i32, i32) {
    %c1_i32 = arith.constant 1 : i32
    %0 = arith.muli %arg0, %c1_i32 : i32
    %1 = arith.addi %0, %arg1 : i32
    %2 = arith.index_cast %1 : i32 to index
    %3 = memref.load %arg3[%2] : memref<1xi32, #tpu.memory_space<smem>>
    %c0_i32 = arith.constant 0 : i32
    %c0_i32_0 = arith.constant 0 : i32
    return %3, %c0_i32 : i32, i32
  }
  func.func @transform_2(%arg0: i32, %arg1: i32, %arg2: memref<1xi32, #tpu.memory_space<smem>>, %arg3: memref<1xi32, #tpu.memory_space<smem>>) -> (i32, i32) {
    %c1_i32 = arith.constant 1 : i32
    %0 = arith.muli %arg0, %c1_i32 : i32
    %1 = arith.addi %0, %arg1 : i32
    %2 = arith.index_cast %1 : i32 to index
    %3 = memref.load %arg2[%2] : memref<1xi32, #tpu.memory_space<smem>>
    %c1_i32_0 = arith.constant 1 : i32
    %4 = arith.muli %arg0, %c1_i32_0 : i32
    %5 = arith.addi %4, %arg1 : i32
    %6 = arith.index_cast %5 : i32 to index
    %7 = memref.load %arg3[%6] : memref<1xi32, #tpu.memory_space<smem>>
    %c0_i32 = arith.constant 0 : i32
    return %3, %7 : i32, i32
  }
  func.func @transform_3(%arg0: i32, %arg1: i32, %arg2: memref<1xi32, #tpu.memory_space<smem>>, %arg3: memref<1xi32, #tpu.memory_space<smem>>) -> (i32, i32, i32) {
    %c0_i32 = arith.constant 0 : i32
    %c0_i32_0 = arith.constant 0 : i32
    %c0_i32_1 = arith.constant 0 : i32
    return %arg0, %c0_i32, %c0_i32_0 : i32, i32, i32
  }
}

</mosaic_0001>

<llo_original>
// kernel: tpu_custom_call.1
$region0: #{tpu_custom_call.1}
  #allocation0 [shape = 'u32[]', space=smem, size = 0x4, offset = 0x4, fixed_abs, tag = 'smem constant byte address 0x4 - core index']
  #allocation1 [shape = 'u32[144,128]{1,0:T(1,128)}', space=vmem, size = 0x12000, scoped, tag = 'internal scratch']
  #allocation2 [shape = 'f32[128,1]{1,0:T(8,128)}', space=vmem, size = 0x10000, scoped, tag = 'scratch operand']
  #allocation3 [shape = 's32[1]{0}', space=sflag, size = 0x4, scoped, tag = 'scoped memory for tpu_custom_call.1']
  #allocation4 [shape = 's32[1]{0:T(128)S(6)}', space=smem, size = 0x200, scoped, tag = 'prefetched SMEM operand 0']
  #allocation5 [shape = 's32[1]{0:T(128)S(6)}', space=smem, size = 0x200, scoped, tag = 'prefetched SMEM operand 1']
  %s0 = inlined_call_operand.<no memory space> [shape: s32[1], index: 0, kind: input, shape index: {}]
  %s1 = inlined_call_operand.<no memory space> [shape: s32[1], index: 1, kind: input, shape index: {}]
  %s2 = inlined_call_operand.vmem [shape: f32[128,32], index: 2, kind: input, shape index: {}]
  %s3 = inlined_call_operand.vmem [shape: f32[128,32], index: 3, kind: input, shape index: {}]
  %s4 = inlined_call_operand.vmem [shape: f32[128,128], index: 4, kind: input, shape index: {}]
  %s5 = inlined_call_operand.hbm [shape: f32[1,8,128], index: 5, kind: output, shape index: {}]
  %s6 = sld [smem:[#allocation0]]
  $region30: #{tpu_custom_call.1} parent=0
    _
  %s8 = ssub.s32 1, %s6
  %s9 = scalar_select 0, %s8, %s6
  %10 = sst [smem:[#allocation4]] %s0
  %11 = sst [smem:[#allocation5]] %s1
  $region1: #{tpu_custom_call.1} parent=0
    #allocation6 [shape = 'u8[4096]{0}', space=vmem, size = 0x1000, scoped, tag = 'output window, operand 0, single buffered']
    #allocation7 [shape = 's32[1]{0}', space=sflag, size = 0x4, scoped, tag = 'scoped memory for tpu_custom_call.1']
    %12 = vsyncpa [#allocation7], 0
    // Predicated region
    $region2: #{tpu_custom_call.1} parent=1 // pred_check
      _
    $region3: #{tpu_custom_call.1} parent=1 // pred_check_branch
      %14 = sbr.rel (0) target = $region5
    $region4: #{tpu_custom_call.1} parent=1 // pred_region
      %s15 = sadd.s32 0, 0
      %s16 = sld [smem:[#allocation4 + %s15]]
      %s17 = smul.u32 16, %s16
      %p18 = scmp.lt.s32.totalorder %s17, 15
      %s19 = scalar_select %p18, %s17, 15
      %s20 = smul.addr %s19, 8
      %s21 = scalar_lea.vmem %s2, %s20
      %s22 = sadd.s32 0, 0
      %s23 = sld [smem:[#allocation4 + %s22]]
      %s24 = smul.u32 16, %s23
    $region5: #{tpu_custom_call.1} parent=1 // pred_fallthru
      _
    // Predicated region
    $region6: #{tpu_custom_call.1} parent=1 // pred_check
      _
    $region7: #{tpu_custom_call.1} parent=1 // pred_check_branch
      %26 = sbr.rel (0) target = $region9
    $region8: #{tpu_custom_call.1} parent=1 // pred_region
      %s27 = sadd.s32 0, 0
      %s28 = sld [smem:[#allocation5 + %s27]]
      %s29 = smul.u32 16, %s28
      %p30 = scmp.lt.s32.totalorder %s29, 15
      %s31 = scalar_select %p30, %s29, 15
      %s32 = smul.addr %s31, 8
      %s33 = scalar_lea.vmem %s3, %s32
      %s34 = sadd.s32 0, 0
      %s35 = sld [smem:[#allocation5 + %s34]]
      %s36 = smul.u32 16, %s35
    $region9: #{tpu_custom_call.1} parent=1 // pred_fallthru
      _
    // Predicated region
    $region10: #{tpu_custom_call.1} parent=1 // pred_check
      _
    $region11: #{tpu_custom_call.1} parent=1 // pred_check_branch
      %38 = sbr.rel (0) target = $region13
    $region12: #{tpu_custom_call.1} parent=1 // pred_region
      %s39 = sadd.s32 0, 0
      %s40 = sld [smem:[#allocation4 + %s39]]
      %s41 = sld [smem:[#allocation5 + %s39]]
      %s42 = smul.u32 16, %s40
      %p43 = scmp.lt.s32.totalorder %s42, 15
      %s44 = scalar_select %p43, %s42, 15
      %p45 = scmp.lt.s32.totalorder %s41, 0
      %s46 = scalar_select %p45, %s41, 0
      %s47 = sadd.s32 %s46, %s44
      %s48 = smul.addr %s47, 8
      %s49 = scalar_lea.vmem %s4, %s48
      %s50 = sadd.s32 0, 0
      %s51 = sld [smem:[#allocation4 + %s50]]
      %s52 = sld [smem:[#allocation5 + %s50]]
      %s53 = smul.u32 16, %s51
    $region13: #{tpu_custom_call.1} parent=1 // pred_fallthru
      _
    %s54 = sadd.s32 0, 0
    %s55 = sld [smem:[#allocation4 + %s54]]
    %s56 = smul.u32 16, %s55
    %p57 = scmp.lt.s32.totalorder %s56, 15
    %s58 = scalar_select %p57, %s56, 15
    %s59 = smul.addr %s58, 8
    %s60 = scalar_lea.vmem %s2, %s59
    %s61 = sadd.s32 0, 0
    %s62 = sld [smem:[#allocation5 + %s61]]
    %s63 = smul.u32 16, %s62
    %p64 = scmp.lt.s32.totalorder %s63, 15
    %s65 = scalar_select %p64, %s63, 15
    %s66 = smul.addr %s65, 8
    %s67 = scalar_lea.vmem %s3, %s66
    %s68 = sadd.s32 0, 0
    %s69 = sld [smem:[#allocation4 + %s68]]
    %s70 = sld [smem:[#allocation5 + %s68]]
    %s71 = smul.u32 16, %s69
    %p72 = scmp.lt.s32.totalorder %s71, 15
    %s73 = scalar_select %p72, %s71, 15
    %p74 = scmp.lt.s32.totalorder %s70, 0
    %s75 = scalar_select %p74, %s70, 0
    %s76 = sadd.s32 %s75, %s73
    %s77 = smul.addr %s76, 8
    %s78 = scalar_lea.vmem %s4, %s77
    %s79 = sadd.s32 0, 0
    %s80 = sld [smem:[#allocation4 + %s79]]
    %s81 = smul.u32 16, %s80
    %p82 = scmp.lt.s32.totalorder %s81, 15
    %s83 = scalar_select %p82, %s81, 15
    %s84 = smul.addr %s83, 8
    %s85 = scalar_lea.vmem %s2, %s84
    %s86 = sadd.s32 0, 0
    %s87 = sld [smem:[#allocation4 + %s86]]
    %s88 = smul.u32 16, %s87
    %s89 = sadd.s32 0, 0
    %s90 = sld [smem:[#allocation5 + %s89]]
    %s91 = smul.u32 16, %s90
    %p92 = scmp.lt.s32.totalorder %s91, 15
    %s93 = scalar_select %p92, %s91, 15
    %s94 = smul.addr %s93, 8
    %s95 = scalar_lea.vmem %s3, %s94
    %s96 = sadd.s32 0, 0
    %s97 = sld [smem:[#allocation5 + %s96]]
    %s98 = smul.u32 16, %s97
    %s99 = sadd.s32 0, 0
    %s100 = sld [smem:[#allocation4 + %s99]]
    %s101 = sld [smem:[#allocation5 + %s99]]
    %s102 = smul.u32 16, %s100
    %p103 = scmp.lt.s32.totalorder %s102, 15
    %s104 = scalar_select %p103, %s102, 15
    %p105 = scmp.lt.s32.totalorder %s101, 0
    %s106 = scalar_select %p105, %s101, 0
    %s107 = sadd.s32 %s106, %s104
    %s108 = smul.addr %s107, 8
    %s109 = scalar_lea.vmem %s4, %s108
    %s110 = sadd.s32 0, 0
    %s111 = sld [smem:[#allocation4 + %s110]]
    %s112 = sld [smem:[#allocation5 + %s110]]
    %s113 = smul.u32 16, %s111
    %p115 = scmp.eq.s32.totalorder 0, 0
    // Predicated region
    $region14: #{tpu_custom_call.1} parent=1 // pred_check
      %p116 = pneg %p115
    $region15: #{tpu_custom_call.1} parent=1 // pred_check_branch
      %118 = sbr.rel (%p116) target = $region17
    $region16: #{tpu_custom_call.1} parent=1 // pred_region
      %vm119 = vcmask 7168
      %120 = vst.msk [vmem:[#allocation2] sm:$0xff] %vm119, 0.0
      %121 = vst.msk [vmem:[#allocation2 + $0x8] sm:$0xff] %vm119, 0.0
      %122 = vst.msk [vmem:[#allocation2 + $0x10] sm:$0xff] %vm119, 0.0
      %123 = vst.msk [vmem:[#allocation2 + $0x18] sm:$0xff] %vm119, 0.0
      %124 = vst.msk [vmem:[#allocation2 + $0x20] sm:$0xff] %vm119, 0.0
      %125 = vst.msk [vmem:[#allocation2 + $0x28] sm:$0xff] %vm119, 0.0
      %126 = vst.msk [vmem:[#allocation2 + $0x30] sm:$0xff] %vm119, 0.0
      %127 = vst.msk [vmem:[#allocation2 + $0x38] sm:$0xff] %vm119, 0.0
      %128 = vst.msk [vmem:[#allocation2 + $0x40] sm:$0xff] %vm119, 0.0
      %129 = vst.msk [vmem:[#allocation2 + $0x48] sm:$0xff] %vm119, 0.0
      %130 = vst.msk [vmem:[#allocation2 + $0x50] sm:$0xff] %vm119, 0.0
      %131 = vst.msk [vmem:[#allocation2 + $0x58] sm:$0xff] %vm119, 0.0
      %132 = vst.msk [vmem:[#allocation2 + $0x60] sm:$0xff] %vm119, 0.0
      %133 = vst.msk [vmem:[#allocation2 + $0x68] sm:$0xff] %vm119, 0.0
      %134 = vst.msk [vmem:[#allocation2 + $0x70] sm:$0xff] %vm119, 0.0
      %135 = vst.msk [vmem:[#allocation2 + $0x78] sm:$0xff] %vm119, 0.0
    $region17: #{tpu_custom_call.1} parent=1 // pred_fallthru
      _
    %s136 = sadd.s32 0, 0
    %s137 = sld [smem:[#allocation4 + %s136]]
    %s138 = sld [smem:[#allocation5 + %s136]]
    %v139 = vld [vmem:[%s85] sm:$0xff]
    %v140 = vld [vmem:[%s85 + $0x8] sm:$0xff]
    %v141 = vld [vmem:[%s85 + $0x10] sm:$0xff]
    %v142 = vld [vmem:[%s85 + $0x18] sm:$0xff]
    %v143 = vld [vmem:[%s85 + $0x20] sm:$0xff]
    %v144 = vld [vmem:[%s85 + $0x28] sm:$0xff]
    %v145 = vld [vmem:[%s85 + $0x30] sm:$0xff]
    %v146 = vld [vmem:[%s85 + $0x38] sm:$0xff]
    %v147 = vld [vmem:[%s85 + $0x40] sm:$0xff]
    %v148 = vld [vmem:[%s85 + $0x48] sm:$0xff]
    %v149 = vld [vmem:[%s85 + $0x50] sm:$0xff]
    %v150 = vld [vmem:[%s85 + $0x58] sm:$0xff]
    %v151 = vld [vmem:[%s85 + $0x60] sm:$0xff]
    %v152 = vld [vmem:[%s85 + $0x68] sm:$0xff]
    %v153 = vld [vmem:[%s85 + $0x70] sm:$0xff]
    %v154 = vld [vmem:[%s85 + $0x78] sm:$0xff]
    %v155 = vmul.f32 %v139, %v139
    %v156 = vmul.f32 %v140, %v140
    %v157 = vmul.f32 %v141, %v141
    %v158 = vmul.f32 %v142, %v142
    %v159 = vmul.f32 %v143, %v143
    %v160 = vmul.f32 %v144, %v144
    %v161 = vmul.f32 %v145, %v145
    %v162 = vmul.f32 %v146, %v146
    %v163 = vmul.f32 %v147, %v147
    %v164 = vmul.f32 %v148, %v148
    %v165 = vmul.f32 %v149, %v149
    %v166 = vmul.f32 %v150, %v150
    %v167 = vmul.f32 %v151, %v151
    %v168 = vmul.f32 %v152, %v152
    %v169 = vmul.f32 %v153, %v153
    %v170 = vmul.f32 %v154, %v154
    %vm171 = vcmask 261120
    %v172 = vsel %vm171, %v155, 0.0
    %173 = vadd.xlane.f32.xlu0 %v172
    %v174 = vpop.xlane.xlu0 %173
    %v175 = vsel %vm171, %v156, 0.0
    %176 = vadd.xlane.f32.xlu0 %v175
    %v177 = vpop.xlane.xlu0 %176
    %v178 = vsel %vm171, %v157, 0.0
    %179 = vadd.xlane.f32.xlu0 %v178
    %v180 = vpop.xlane.xlu0 %179
    %v181 = vsel %vm171, %v158, 0.0
    %182 = vadd.xlane.f32.xlu0 %v181
    %v183 = vpop.xlane.xlu0 %182
    %v184 = vsel %vm171, %v159, 0.0
    %185 = vadd.xlane.f32.xlu0 %v184
    %v186 = vpop.xlane.xlu0 %185
    %v187 = vsel %vm171, %v160, 0.0
    %188 = vadd.xlane.f32.xlu0 %v187
    %v189 = vpop.xlane.xlu0 %188
    %v190 = vsel %vm171, %v161, 0.0
    %191 = vadd.xlane.f32.xlu0 %v190
    %v192 = vpop.xlane.xlu0 %191
    %v193 = vsel %vm171, %v162, 0.0
    %194 = vadd.xlane.f32.xlu0 %v193
    %v195 = vpop.xlane.xlu0 %194
    %v196 = vsel %vm171, %v163, 0.0
    %197 = vadd.xlane.f32.xlu0 %v196
    %v198 = vpop.xlane.xlu0 %197
    %v199 = vsel %vm171, %v164, 0.0
    %200 = vadd.xlane.f32.xlu0 %v199
    %v201 = vpop.xlane.xlu0 %200
    %v202 = vsel %vm171, %v165, 0.0
    %203 = vadd.xlane.f32.xlu0 %v202
    %v204 = vpop.xlane.xlu0 %203
    %v205 = vsel %vm171, %v166, 0.0
    %206 = vadd.xlane.f32.xlu0 %v205
    %v207 = vpop.xlane.xlu0 %206
    %v208 = vsel %vm171, %v167, 0.0
    %209 = vadd.xlane.f32.xlu0 %v208
    %v210 = vpop.xlane.xlu0 %209
    %v211 = vsel %vm171, %v168, 0.0
    %212 = vadd.xlane.f32.xlu0 %v211
    %v213 = vpop.xlane.xlu0 %212
    %v214 = vsel %vm171, %v169, 0.0
    %215 = vadd.xlane.f32.xlu0 %v214
    %v216 = vpop.xlane.xlu0 %215
    %v217 = vsel %vm171, %v170, 0.0
    %218 = vadd.xlane.f32.xlu0 %v217
    %v219 = vpop.xlane.xlu0 %218
    %v220 = vmax.f32 %v174, 1e-24
    %v221 = vmax.f32 %v177, 1e-24
    %v222 = vmax.f32 %v180, 1e-24
    %v223 = vmax.f32 %v183, 1e-24
    %v224 = vmax.f32 %v186, 1e-24
    %v225 = vmax.f32 %v189, 1e-24
    %v226 = vmax.f32 %v192, 1e-24
    %v227 = vmax.f32 %v195, 1e-24
    %v228 = vmax.f32 %v198, 1e-24
    %v229 = vmax.f32 %v201, 1e-24
    %v230 = vmax.f32 %v204, 1e-24
    %v231 = vmax.f32 %v207, 1e-24
    %v232 = vmax.f32 %v210, 1e-24
    %v233 = vmax.f32 %v213, 1e-24
    %v234 = vmax.f32 %v216, 1e-24
    %v235 = vmax.f32 %v219, 1e-24
    %v236 = vrsqrt.pop %v220
    %v237 = vrsqrt.pop %v221
    %v238 = vrsqrt.pop %v222
    %v239 = vrsqrt.pop %v223
    %v240 = vrsqrt.pop %v224
    %v241 = vrsqrt.pop %v225
    %v242 = vrsqrt.pop %v226
    %v243 = vrsqrt.pop %v227
    %v244 = vrsqrt.pop %v228
    %v245 = vrsqrt.pop %v229
    %v246 = vrsqrt.pop %v230
    %v247 = vrsqrt.pop %v231
    %v248 = vrsqrt.pop %v232
    %v249 = vrsqrt.pop %v233
    %v250 = vrsqrt.pop %v234
    %v251 = vrsqrt.pop %v235
    %v252 = vmul.f32 %v139, %v236
    %v253 = vmul.f32 %v140, %v237
    %v254 = vmul.f32 %v141, %v238
    %v255 = vmul.f32 %v142, %v239
    %v256 = vmul.f32 %v143, %v240
    %v257 = vmul.f32 %v144, %v241
    %v258 = vmul.f32 %v145, %v242
    %v259 = vmul.f32 %v146, %v243
    %v260 = vmul.f32 %v147, %v244
    %v261 = vmul.f32 %v148, %v245
    %v262 = vmul.f32 %v149, %v246
    %v263 = vmul.f32 %v150, %v247
    %v264 = vmul.f32 %v151, %v248
    %v265 = vmul.f32 %v152, %v249
    %v266 = vmul.f32 %v153, %v250
    %v267 = vmul.f32 %v154, %v251
    %v268 = vpack.c.bf16 %v253, %v252
    %v269 = vpack.c.bf16 %v255, %v254
    %v270 = vpack.c.bf16 %v257, %v256
    %v271 = vpack.c.bf16 %v259, %v258
    %v272 = vpack.c.bf16 %v261, %v260
    %v273 = vpack.c.bf16 %v263, %v262
    %v274 = vpack.c.bf16 %v265, %v264
    %v275 = vpack.c.bf16 %v267, %v266
    %v276 = vld [vmem:[%s95] sm:$0xff]
    %v277 = vld [vmem:[%s95 + $0x8] sm:$0xff]
    %v278 = vld [vmem:[%s95 + $0x10] sm:$0xff]
    %v279 = vld [vmem:[%s95 + $0x18] sm:$0xff]
    %v280 = vld [vmem:[%s95 + $0x20] sm:$0xff]
    %v281 = vld [vmem:[%s95 + $0x28] sm:$0xff]
    %v282 = vld [vmem:[%s95 + $0x30] sm:$0xff]
    %v283 = vld [vmem:[%s95 + $0x38] sm:$0xff]
    %v284 = vld [vmem:[%s95 + $0x40] sm:$0xff]
    %v285 = vld [vmem:[%s95 + $0x48] sm:$0xff]
    %v286 = vld [vmem:[%s95 + $0x50] sm:$0xff]
    %v287 = vld [vmem:[%s95 + $0x58] sm:$0xff]
    %v288 = vld [vmem:[%s95 + $0x60] sm:$0xff]
    %v289 = vld [vmem:[%s95 + $0x68] sm:$0xff]
    %v290 = vld [vmem:[%s95 + $0x70] sm:$0xff]
    %v291 = vld [vmem:[%s95 + $0x78] sm:$0xff]
    %v292 = vmul.f32 %v276, %v276
    %v293 = vmul.f32 %v277, %v277
    %v294 = vmul.f32 %v278, %v278
    %v295 = vmul.f32 %v279, %v279
    %v296 = vmul.f32 %v280, %v280
    %v297 = vmul.f32 %v281, %v281
    %v298 = vmul.f32 %v282, %v282
    %v299 = vmul.f32 %v283, %v283
    %v300 = vmul.f32 %v284, %v284
    %v301 = vmul.f32 %v285, %v285
    %v302 = vmul.f32 %v286, %v286
    %v303 = vmul.f32 %v287, %v287
    %v304 = vmul.f32 %v288, %v288
    %v305 = vmul.f32 %v289, %v289
    %v306 = vmul.f32 %v290, %v290
    %v307 = vmul.f32 %v291, %v291
    %v308 = vsel %vm171, %v292, 0.0
    %309 = vadd.xlane.f32.xlu0 %v308
    %v310 = vpop.xlane.xlu0 %309
    %v311 = vsel %vm171, %v293, 0.0
    %312 = vadd.xlane.f32.xlu0 %v311
    %v313 = vpop.xlane.xlu0 %312
    %v314 = vsel %vm171, %v294, 0.0
    %315 = vadd.xlane.f32.xlu0 %v314
    %v316 = vpop.xlane.xlu0 %315
    %v317 = vsel %vm171, %v295, 0.0
    %318 = vadd.xlane.f32.xlu0 %v317
    %v319 = vpop.xlane.xlu0 %318
    %v320 = vsel %vm171, %v296, 0.0
    %321 = vadd.xlane.f32.xlu0 %v320
    %v322 = vpop.xlane.xlu0 %321
    %v323 = vsel %vm171, %v297, 0.0
    %324 = vadd.xlane.f32.xlu0 %v323
    %v325 = vpop.xlane.xlu0 %324
    %v326 = vsel %vm171, %v298, 0.0
    %327 = vadd.xlane.f32.xlu0 %v326
    %v328 = vpop.xlane.xlu0 %327
    %v329 = vsel %vm171, %v299, 0.0
    %330 = vadd.xlane.f32.xlu0 %v329
    %v331 = vpop.xlane.xlu0 %330
    %v332 = vsel %vm171, %v300, 0.0
    %333 = vadd.xlane.f32.xlu0 %v332
    %v334 = vpop.xlane.xlu0 %333
    %v335 = vsel %vm171, %v301, 0.0
    %336 = vadd.xlane.f32.xlu0 %v335
    %v337 = vpop.xlane.xlu0 %336
    %v338 = vsel %vm171, %v302, 0.0
    %339 = vadd.xlane.f32.xlu0 %v338
    %v340 = vpop.xlane.xlu0 %339
    %v341 = vsel %vm171, %v303, 0.0
    %342 = vadd.xlane.f32.xlu0 %v341
    %v343 = vpop.xlane.xlu0 %342
    %v344 = vsel %vm171, %v304, 0.0
    %345 = vadd.xlane.f32.xlu0 %v344
    %v346 = vpop.xlane.xlu0 %345
    %v347 = vsel %vm171, %v305, 0.0
    %348 = vadd.xlane.f32.xlu0 %v347
    %v349 = vpop.xlane.xlu0 %348
    %v350 = vsel %vm171, %v306, 0.0
    %351 = vadd.xlane.f32.xlu0 %v350
    %v352 = vpop.xlane.xlu0 %351
    %v353 = vsel %vm171, %v307, 0.0
    %354 = vadd.xlane.f32.xlu0 %v353
    %v355 = vpop.xlane.xlu0 %354
    %v356 = vmax.f32 %v310, 1e-24
    %v357 = vmax.f32 %v313, 1e-24
    %v358 = vmax.f32 %v316, 1e-24
    %v359 = vmax.f32 %v319, 1e-24
    %v360 = vmax.f32 %v322, 1e-24
    %v361 = vmax.f32 %v325, 1e-24
    %v362 = vmax.f32 %v328, 1e-24
    %v363 = vmax.f32 %v331, 1e-24
    %v364 = vmax.f32 %v334, 1e-24
    %v365 = vmax.f32 %v337, 1e-24
    %v366 = vmax.f32 %v340, 1e-24
    %v367 = vmax.f32 %v343, 1e-24
    %v368 = vmax.f32 %v346, 1e-24
    %v369 = vmax.f32 %v349, 1e-24
    %v370 = vmax.f32 %v352, 1e-24
    %v371 = vmax.f32 %v355, 1e-24
    %v372 = vrsqrt.pop %v356
    %v373 = vrsqrt.pop %v357
    %v374 = vrsqrt.pop %v358
    %v375 = vrsqrt.pop %v359
    %v376 = vrsqrt.pop %v360
    %v377 = vrsqrt.pop %v361
    %v378 = vrsqrt.pop %v362
    %v379 = vrsqrt.pop %v363
    %v380 = vrsqrt.pop %v364
    %v381 = vrsqrt.pop %v365
    %v382 = vrsqrt.pop %v366
    %v383 = vrsqrt.pop %v367
    %v384 = vrsqrt.pop %v368
    %v385 = vrsqrt.pop %v369
    %v386 = vrsqrt.pop %v370
    %v387 = vrsqrt.pop %v371
    %v388 = vmul.f32 %v276, %v372
    %v389 = vmul.f32 %v277, %v373
    %v390 = vmul.f32 %v278, %v374
    %v391 = vmul.f32 %v279, %v375
    %v392 = vmul.f32 %v280, %v376
    %v393 = vmul.f32 %v281, %v377
    %v394 = vmul.f32 %v282, %v378
    %v395 = vmul.f32 %v283, %v379
    %v396 = vmul.f32 %v284, %v380
    %v397 = vmul.f32 %v285, %v381
    %v398 = vmul.f32 %v286, %v382
    %v399 = vmul.f32 %v287, %v383
    %v400 = vmul.f32 %v288, %v384
    %v401 = vmul.f32 %v289, %v385
    %v402 = vmul.f32 %v290, %v386
    %v403 = vmul.f32 %v291, %v387
    %v404 = vpack.c.bf16 %v389, %v388
    %v405 = vpack.c.bf16 %v391, %v390
    %v406 = vpack.c.bf16 %v393, %v392
    %v407 = vpack.c.bf16 %v395, %v394
    %v408 = vpack.c.bf16 %v397, %v396
    %v409 = vpack.c.bf16 %v399, %v398
    %v410 = vpack.c.bf16 %v401, %v400
    %v411 = vpack.c.bf16 %v403, %v402
    %v413 = vsel %vm171, %v268, 0
    %v416 = vsel %vm171, %v269, 0
    %v419 = vsel %vm171, %v270, 0
    %v422 = vsel %vm171, %v271, 0
    %v425 = vsel %vm171, %v272, 0
    %v428 = vsel %vm171, %v273, 0
    %v431 = vsel %vm171, %v274, 0
    %v434 = vsel %vm171, %v275, 0
    %v437 = vsel %vm171, %v404, 0
    %v440 = vsel %vm171, %v405, 0
    %v443 = vsel %vm171, %v406, 0
    %v446 = vsel %vm171, %v407, 0
    %v449 = vsel %vm171, %v408, 0
    %v452 = vsel %vm171, %v409, 0
    %v455 = vsel %vm171, %v410, 0
    %v458 = vsel %vm171, %v411, 0
    %460 = vmatprep.subr.bf16.mxu0 0
    %461 = vmatpush1.bf16.xpose.msra.mxu0 %v437
    %462 = vmatprep.subr.bf16.mxu0 0
    %463 = vmatpush1.bf16.xpose.msra.mxu0 %v440
    %464 = vmatprep.subr.bf16.mxu0 0
    %465 = vmatpush1.bf16.xpose.msra.mxu0 %v443
    %466 = vmatprep.subr.bf16.mxu0 0
    %467 = vmatpush1.bf16.xpose.msra.mxu0 %v446
    %468 = vmatprep.subr.bf16.mxu0 0
    %469 = vmatpush1.bf16.xpose.msra.mxu0 %v449
    %470 = vmatprep.subr.bf16.mxu0 0
    %471 = vmatpush1.bf16.xpose.msra.mxu0 %v452
    %472 = vmatprep.subr.bf16.mxu0 0
    %473 = vmatpush1.bf16.xpose.msra.mxu0 %v455
    %474 = vmatprep.subr.bf16.mxu0 0
    %475 = vmatpush1.bf16.xpose.msra.mxu0 %v458
    %476 = vmatprep.subr.bf16.mxu0 0
    %477 = vmatpush1.bf16.xpose.msra.mxu0 0
    %478 = vmatprep.subr.bf16.mxu0 0
    %479 = vmatpush1.bf16.xpose.msra.mxu0 0
    %480 = vmatprep.subr.bf16.mxu0 0
    %481 = vmatpush1.bf16.xpose.msra.mxu0 0
    %482 = vmatprep.subr.bf16.mxu0 0
    %483 = vmatpush1.bf16.xpose.msra.mxu0 0
    %484 = vmatprep.subr.bf16.mxu0 0
    %485 = vmatpush1.bf16.xpose.msra.mxu0 0
    %486 = vmatprep.subr.bf16.mxu0 0
    %487 = vmatpush1.bf16.xpose.msra.mxu0 0
    %488 = vmatprep.subr.bf16.mxu0 0
    %489 = vmatpush1.bf16.xpose.msra.mxu0 0
    %490 = vmatprep.subr.bf16.mxu0 0
    %491 = vmatpush1.bf16.xpose.msra.mxu0 0
    %492 = vmatprep.mubr.bf16.mxu0 0
    %493 = vmatmul.mubr.bf16.gmra.mrb[0].mxu0 %v413
    %v494 = vpop.f32.mrb[0].mxu0
    %v495 = vadd.f32 0.0, %v494
    %v496 = vpop.f32.mrb[0].mxu0
    %v497 = vpop.f32.mrb[0].mxu0
    %v498 = vadd.f32 0.0, %v497
    %v499 = vpop.f32.mrb[0].mxu0
    %500 = vmatprep.mubr.bf16.mxu0 0
    %501 = vmatmul.mubr.bf16.gmra.mrb[0].mxu0 %v416
    %v502 = vpop.f32.mrb[0].mxu0
    %v503 = vadd.f32 0.0, %v502
    %v504 = vpop.f32.mrb[0].mxu0
    %v505 = vpop.f32.mrb[0].mxu0
    %v506 = vadd.f32 0.0, %v505
    %v507 = vpop.f32.mrb[0].mxu0
    %508 = vmatprep.mubr.bf16.mxu0 0
    %509 = vmatmul.mubr.bf16.gmra.mrb[0].mxu0 %v419
    %v510 = vpop.f32.mrb[0].mxu0
    %v511 = vadd.f32 0.0, %v510
    %v512 = vpop.f32.mrb[0].mxu0
    %v513 = vpop.f32.mrb[0].mxu0
    %v514 = vadd.f32 0.0, %v513
    %v515 = vpop.f32.mrb[0].mxu0
    %516 = vmatprep.mubr.bf16.mxu0 0
    %517 = vmatmul.mubr.bf16.gmra.mrb[0].mxu0 %v422
    %v518 = vpop.f32.mrb[0].mxu0
    %v519 = vadd.f32 0.0, %v518
    %v520 = vpop.f32.mrb[0].mxu0
    %v521 = vpop.f32.mrb[0].mxu0
    %v522 = vadd.f32 0.0, %v521
    %v523 = vpop.f32.mrb[0].mxu0
    %524 = vmatprep.mubr.bf16.mxu0 0
    %525 = vmatmul.mubr.bf16.gmra.mrb[0].mxu0 %v425
    %v526 = vpop.f32.mrb[0].mxu0
    %v527 = vadd.f32 0.0, %v526
    %v528 = vpop.f32.mrb[0].mxu0
    %v529 = vpop.f32.mrb[0].mxu0
    %v530 = vadd.f32 0.0, %v529
    %v531 = vpop.f32.mrb[0].mxu0
    %532 = vmatprep.mubr.bf16.mxu0 0
    %533 = vmatmul.mubr.bf16.gmra.mrb[0].mxu0 %v428
    %v534 = vpop.f32.mrb[0].mxu0
    %v535 = vadd.f32 0.0, %v534
    %v536 = vpop.f32.mrb[0].mxu0
    %v537 = vpop.f32.mrb[0].mxu0
    %v538 = vadd.f32 0.0, %v537
    %v539 = vpop.f32.mrb[0].mxu0
    %540 = vmatprep.mubr.bf16.mxu0 0
    %541 = vmatmul.mubr.bf16.gmra.mrb[0].mxu0 %v431
    %v542 = vpop.f32.mrb[0].mxu0
    %v543 = vadd.f32 0.0, %v542
    %v544 = vpop.f32.mrb[0].mxu0
    %v545 = vpop.f32.mrb[0].mxu0
    %v546 = vadd.f32 0.0, %v545
    %v547 = vpop.f32.mrb[0].mxu0
    %548 = vmatprep.mubr.bf16.mxu0 0
    %549 = vmatmul.mubr.bf16.gmra.mrb[0].mxu0 %v434
    %v550 = vpop.f32.mrb[0].mxu0
    %v551 = vadd.f32 0.0, %v550
    %v552 = vpop.f32.mrb[0].mxu0
    %v553 = vpop.f32.mrb[0].mxu0
    %v554 = vadd.f32 0.0, %v553
    %v555 = vpop.f32.mrb[0].mxu0
    %556 = vdwg.mxu0
    %v557 = vld [vmem:[%s109] sm:$0xff]
    %v558 = vld [vmem:[%s109 + $0x8] sm:$0xff]
    %v559 = vld [vmem:[%s109 + $0x10] sm:$0xff]
    %v560 = vld [vmem:[%s109 + $0x18] sm:$0xff]
    %v561 = vld [vmem:[%s109 + $0x20] sm:$0xff]
    %v562 = vld [vmem:[%s109 + $0x28] sm:$0xff]
    %v563 = vld [vmem:[%s109 + $0x30] sm:$0xff]
    %v564 = vld [vmem:[%s109 + $0x38] sm:$0xff]
    %v565 = vld [vmem:[%s109 + $0x40] sm:$0xff]
    %v566 = vld [vmem:[%s109 + $0x48] sm:$0xff]
    %v567 = vld [vmem:[%s109 + $0x50] sm:$0xff]
    %v568 = vld [vmem:[%s109 + $0x58] sm:$0xff]
    %v569 = vld [vmem:[%s109 + $0x60] sm:$0xff]
    %v570 = vld [vmem:[%s109 + $0x68] sm:$0xff]
    %v571 = vld [vmem:[%s109 + $0x70] sm:$0xff]
    %v572 = vld [vmem:[%s109 + $0x78] sm:$0xff]
    %v573 = vsub.f32 %v495, %v557
    %v574 = vsub.f32 %v498, %v558
    %v575 = vsub.f32 %v503, %v559
    %v576 = vsub.f32 %v506, %v560
    %v577 = vsub.f32 %v511, %v561
    %v578 = vsub.f32 %v514, %v562
    %v579 = vsub.f32 %v519, %v563
    %v580 = vsub.f32 %v522, %v564
    %v581 = vsub.f32 %v527, %v565
    %v582 = vsub.f32 %v530, %v566
    %v583 = vsub.f32 %v535, %v567
    %v584 = vsub.f32 %v538, %v568
    %v585 = vsub.f32 %v543, %v569
    %v586 = vsub.f32 %v546, %v570
    %v587 = vsub.f32 %v551, %v571
    %v588 = vsub.f32 %v554, %v572
    %v589 = vmul.f32 %v573, %v573
    %v590 = vmul.f32 %v574, %v574
    %v591 = vmul.f32 %v575, %v575
    %v592 = vmul.f32 %v576, %v576
    %v593 = vmul.f32 %v577, %v577
    %v594 = vmul.f32 %v578, %v578
    %v595 = vmul.f32 %v579, %v579
    %v596 = vmul.f32 %v580, %v580
    %v597 = vmul.f32 %v581, %v581
    %v598 = vmul.f32 %v582, %v582
    %v599 = vmul.f32 %v583, %v583
    %v600 = vmul.f32 %v584, %v584
    %v601 = vmul.f32 %v585, %v585
    %v602 = vmul.f32 %v586, %v586
    %v603 = vmul.f32 %v587, %v587
    %v604 = vmul.f32 %v588, %v588
    %s605 = smul.u32 %s137, 128
    %v606 = vlaneseq
    %v607 = vshrl.u32 %v606, 7
    %v608 = vadd.s32 %v607, 8
    %v609 = vadd.s32 %v607, 16
    %v610 = vadd.s32 %v607, 24
    %v611 = vadd.s32 %v607, 32
    %v612 = vadd.s32 %v607, 40
    %v613 = vadd.s32 %v607, 48
    %v614 = vadd.s32 %v607, 56
    %v615 = vadd.s32 %v607, 64
    %v616 = vadd.s32 %v607, 72
    %v617 = vadd.s32 %v607, 80
    %v618 = vadd.s32 %v607, 88
    %v619 = vadd.s32 %v607, 96
    %v620 = vadd.s32 %v607, 104
    %v621 = vadd.s32 %v607, 112
    %v622 = vadd.s32 %v607, 120
    %v623 = vstv %s605
    %v624 = vadd.s32 %v623, %v607
    %v625 = vadd.s32 %v623, %v608
    %v626 = vadd.s32 %v623, %v609
    %v627 = vadd.s32 %v623, %v610
    %v628 = vadd.s32 %v623, %v611
    %v629 = vadd.s32 %v623, %v612
    %v630 = vadd.s32 %v623, %v613
    %v631 = vadd.s32 %v623, %v614
    %v632 = vadd.s32 %v623, %v615
    %v633 = vadd.s32 %v623, %v616
    %v634 = vadd.s32 %v623, %v617
    %v635 = vadd.s32 %v623, %v618
    %v636 = vadd.s32 %v623, %v619
    %v637 = vadd.s32 %v623, %v620
    %v638 = vadd.s32 %v623, %v621
    %v639 = vadd.s32 %v623, %v622
    %s640 = smul.u32 %s138, 128
    %v641 = vlaneseq
    %v642 = vand.u32 %v641, 127
    %v643 = vstv %s640
    %v644 = vadd.s32 %v643, %v642
    %p645 = scmp.lt.s32.totalorder %s136, 1
    %vm646 = vcmp.gt.s32.totalorder %v644, %v624
    %vm647 = vcmp.gt.s32.totalorder %v644, %v625
    %vm648 = vcmp.gt.s32.totalorder %v644, %v626
    %vm649 = vcmp.gt.s32.totalorder %v644, %v627
    %vm650 = vcmp.gt.s32.totalorder %v644, %v628
    %vm651 = vcmp.gt.s32.totalorder %v644, %v629
    %vm652 = vcmp.gt.s32.totalorder %v644, %v630
    %vm653 = vcmp.gt.s32.totalorder %v644, %v631
    %vm654 = vcmp.gt.s32.totalorder %v644, %v632
    %vm655 = vcmp.gt.s32.totalorder %v644, %v633
    %vm656 = vcmp.gt.s32.totalorder %v644, %v634
    %vm657 = vcmp.gt.s32.totalorder %v644, %v635
    %vm658 = vcmp.gt.s32.totalorder %v644, %v636
    %vm659 = vcmp.gt.s32.totalorder %v644, %v637
    %vm660 = vcmp.gt.s32.totalorder %v644, %v638
    %vm661 = vcmp.gt.s32.totalorder %v644, %v639
    %vm662 = vcmp.lt.s32.totalorder %v644, 8
    %vm663 = vmand %vm646, %vm662
    %vm664 = vmand %vm647, %vm662
    %vm665 = vmand %vm648, %vm662
    %vm666 = vmand %vm649, %vm662
    %vm667 = vmand %vm650, %vm662
    %vm668 = vmand %vm651, %vm662
    %vm669 = vmand %vm652, %vm662
    %vm670 = vmand %vm653, %vm662
    %vm671 = vmand %vm654, %vm662
    %vm672 = vmand %vm655, %vm662
    %vm673 = vmand %vm656, %vm662
    %vm674 = vmand %vm657, %vm662
    %vm675 = vmand %vm658, %vm662
    %vm676 = vmand %vm659, %vm662
    %vm677 = vmand %vm660, %vm662
    %vm678 = vmand %vm661, %vm662
    %s679 = scalar_select %p645, 1, 0
    %v680 = vstv %s679
    %vm681 = vcmp.eq.s32.totalorder %v680, 1
    %vm682 = vmand %vm663, %vm681
    %vm683 = vmand %vm664, %vm681
    %vm684 = vmand %vm665, %vm681
    %vm685 = vmand %vm666, %vm681
    %vm686 = vmand %vm667, %vm681
    %vm687 = vmand %vm668, %vm681
    %vm688 = vmand %vm669, %vm681
    %vm689 = vmand %vm670, %vm681
    %vm690 = vmand %vm671, %vm681
    %vm691 = vmand %vm672, %vm681
    %vm692 = vmand %vm673, %vm681
    %vm693 = vmand %vm674, %vm681
    %vm694 = vmand %vm675, %vm681
    %vm695 = vmand %vm676, %vm681
    %vm696 = vmand %vm677, %vm681
    %vm697 = vmand %vm678, %vm681
    %v698 = vsel %vm682, %v589, 0.0
    %v699 = vsel %vm683, %v590, 0.0
    %v700 = vsel %vm684, %v591, 0.0
    %v701 = vsel %vm685, %v592, 0.0
    %v702 = vsel %vm686, %v593, 0.0
    %v703 = vsel %vm687, %v594, 0.0
    %v704 = vsel %vm688, %v595, 0.0
    %v705 = vsel %vm689, %v596, 0.0
    %v706 = vsel %vm690, %v597, 0.0
    %v707 = vsel %vm691, %v598, 0.0
    %v708 = vsel %vm692, %v599, 0.0
    %v709 = vsel %vm693, %v600, 0.0
    %v710 = vsel %vm694, %v601, 0.0
    %v711 = vsel %vm695, %v602, 0.0
    %v712 = vsel %vm696, %v603, 0.0
    %v713 = vsel %vm697, %v604, 0.0
    %v714 = vld [vmem:[#allocation2] sm:$0xff]
    %v715 = vld [vmem:[#allocation2 + $0x8] sm:$0xff]
    %v716 = vld [vmem:[#allocation2 + $0x10] sm:$0xff]
    %v717 = vld [vmem:[#allocation2 + $0x18] sm:$0xff]
    %v718 = vld [vmem:[#allocation2 + $0x20] sm:$0xff]
    %v719 = vld [vmem:[#allocation2 + $0x28] sm:$0xff]
    %v720 = vld [vmem:[#allocation2 + $0x30] sm:$0xff]
    %v721 = vld [vmem:[#allocation2 + $0x38] sm:$0xff]
    %v722 = vld [vmem:[#allocation2 + $0x40] sm:$0xff]
    %v723 = vld [vmem:[#allocation2 + $0x48] sm:$0xff]
    %v724 = vld [vmem:[#allocation2 + $0x50] sm:$0xff]
    %v725 = vld [vmem:[#allocation2 + $0x58] sm:$0xff]
    %v726 = vld [vmem:[#allocation2 + $0x60] sm:$0xff]
    %v727 = vld [vmem:[#allocation2 + $0x68] sm:$0xff]
    %v728 = vld [vmem:[#allocation2 + $0x70] sm:$0xff]
    %v729 = vld [vmem:[#allocation2 + $0x78] sm:$0xff]
    %730 = vadd.xlane.f32.xlu0 %v698
    %v731 = vpop.xlane.xlu0 %730
    %732 = vadd.xlane.f32.xlu0 %v699
    %v733 = vpop.xlane.xlu0 %732
    %734 = vadd.xlane.f32.xlu0 %v700
    %v735 = vpop.xlane.xlu0 %734
    %736 = vadd.xlane.f32.xlu0 %v701
    %v737 = vpop.xlane.xlu0 %736
    %738 = vadd.xlane.f32.xlu0 %v702
    %v739 = vpop.xlane.xlu0 %738
    %740 = vadd.xlane.f32.xlu0 %v703
    %v741 = vpop.xlane.xlu0 %740
    %742 = vadd.xlane.f32.xlu0 %v704
    %v743 = vpop.xlane.xlu0 %742
    %744 = vadd.xlane.f32.xlu0 %v705
    %v745 = vpop.xlane.xlu0 %744
    %746 = vadd.xlane.f32.xlu0 %v706
    %v747 = vpop.xlane.xlu0 %746
    %748 = vadd.xlane.f32.xlu0 %v707
    %v749 = vpop.xlane.xlu0 %748
    %750 = vadd.xlane.f32.xlu0 %v708
    %v751 = vpop.xlane.xlu0 %750
    %752 = vadd.xlane.f32.xlu0 %v709
    %v753 = vpop.xlane.xlu0 %752
    %754 = vadd.xlane.f32.xlu0 %v710
    %v755 = vpop.xlane.xlu0 %754
    %756 = vadd.xlane.f32.xlu0 %v711
    %v757 = vpop.xlane.xlu0 %756
    %758 = vadd.xlane.f32.xlu0 %v712
    %v759 = vpop.xlane.xlu0 %758
    %760 = vadd.xlane.f32.xlu0 %v713
    %v761 = vpop.xlane.xlu0 %760
    %v762 = vadd.f32 %v714, %v731
    %v763 = vadd.f32 %v715, %v733
    %v764 = vadd.f32 %v716, %v735
    %v765 = vadd.f32 %v717, %v737
    %v766 = vadd.f32 %v718, %v739
    %v767 = vadd.f32 %v719, %v741
    %v768 = vadd.f32 %v720, %v743
    %v769 = vadd.f32 %v721, %v745
    %v770 = vadd.f32 %v722, %v747
    %v771 = vadd.f32 %v723, %v749
    %v772 = vadd.f32 %v724, %v751
    %v773 = vadd.f32 %v725, %v753
    %v774 = vadd.f32 %v726, %v755
    %v775 = vadd.f32 %v727, %v757
    %v776 = vadd.f32 %v728, %v759
    %v777 = vadd.f32 %v729, %v761
    %vm778 = vcmask 7168
    %779 = vst.msk [vmem:[#allocation2] sm:$0xff] %vm778, %v762
    %780 = vst.msk [vmem:[#allocation2 + $0x8] sm:$0xff] %vm778, %v763
    %781 = vst.msk [vmem:[#allocation2 + $0x10] sm:$0xff] %vm778, %v764
    %782 = vst.msk [vmem:[#allocation2 + $0x18] sm:$0xff] %vm778, %v765
    %783 = vst.msk [vmem:[#allocation2 + $0x20] sm:$0xff] %vm778, %v766
    %784 = vst.msk [vmem:[#allocation2 + $0x28] sm:$0xff] %vm778, %v767
    %785 = vst.msk [vmem:[#allocation2 + $0x30] sm:$0xff] %vm778, %v768
    %786 = vst.msk [vmem:[#allocation2 + $0x38] sm:$0xff] %vm778, %v769
    %787 = vst.msk [vmem:[#allocation2 + $0x40] sm:$0xff] %vm778, %v770
    %788 = vst.msk [vmem:[#allocation2 + $0x48] sm:$0xff] %vm778, %v771
    %789 = vst.msk [vmem:[#allocation2 + $0x50] sm:$0xff] %vm778, %v772
    %790 = vst.msk [vmem:[#allocation2 + $0x58] sm:$0xff] %vm778, %v773
    %791 = vst.msk [vmem:[#allocation2 + $0x60] sm:$0xff] %vm778, %v774
    %792 = vst.msk [vmem:[#allocation2 + $0x68] sm:$0xff] %vm778, %v775
    %793 = vst.msk [vmem:[#allocation2 + $0x70] sm:$0xff] %vm778, %v776
    %794 = vst.msk [vmem:[#allocation2 + $0x78] sm:$0xff] %vm778, %v777
    // Predicated region
    $region18: #{tpu_custom_call.1} parent=1 // pred_check
      %p795 = pneg %p115
    $region19: #{tpu_custom_call.1} parent=1 // pred_check_branch
      %797 = sbr.rel (%p795) target = $region21
    $region20: #{tpu_custom_call.1} parent=1 // pred_region
      %v798 = vld [vmem:[#allocation2] sm:$0xff]
      %v799 = vld [vmem:[#allocation2 + $0x8] sm:$0xff]
      %v800 = vld [vmem:[#allocation2 + $0x10] sm:$0xff]
      %v801 = vld [vmem:[#allocation2 + $0x18] sm:$0xff]
      %v802 = vld [vmem:[#allocation2 + $0x20] sm:$0xff]
      %v803 = vld [vmem:[#allocation2 + $0x28] sm:$0xff]
      %v804 = vld [vmem:[#allocation2 + $0x30] sm:$0xff]
      %v805 = vld [vmem:[#allocation2 + $0x38] sm:$0xff]
      %v806 = vld [vmem:[#allocation2 + $0x40] sm:$0xff]
      %v807 = vld [vmem:[#allocation2 + $0x48] sm:$0xff]
      %v808 = vld [vmem:[#allocation2 + $0x50] sm:$0xff]
      %v809 = vld [vmem:[#allocation2 + $0x58] sm:$0xff]
      %v810 = vld [vmem:[#allocation2 + $0x60] sm:$0xff]
      %v811 = vld [vmem:[#allocation2 + $0x68] sm:$0xff]
      %v812 = vld [vmem:[#allocation2 + $0x70] sm:$0xff]
      %v813 = vld [vmem:[#allocation2 + $0x78] sm:$0xff]
      %v814 = vsel %vm778, %v798, 0.0
      %v815 = vsel %vm778, %v799, 0.0
      %v816 = vadd.f32 %v814, %v815
      %v817 = vsel %vm778, %v800, 0.0
      %v818 = vadd.f32 %v816, %v817
      %v819 = vsel %vm778, %v801, 0.0
      %v820 = vadd.f32 %v818, %v819
      %v821 = vsel %vm778, %v802, 0.0
      %v822 = vadd.f32 %v820, %v821
      %v823 = vsel %vm778, %v803, 0.0
      %v824 = vadd.f32 %v822, %v823
      %v825 = vsel %vm778, %v804, 0.0
      %v826 = vadd.f32 %v824, %v825
      %v827 = vsel %vm778, %v805, 0.0
      %v828 = vadd.f32 %v826, %v827
      %v829 = vsel %vm778, %v806, 0.0
      %v830 = vadd.f32 %v828, %v829
      %v831 = vsel %vm778, %v807, 0.0
      %v832 = vadd.f32 %v830, %v831
      %v833 = vsel %vm778, %v808, 0.0
      %v834 = vadd.f32 %v832, %v833
      %v835 = vsel %vm778, %v809, 0.0
      %v836 = vadd.f32 %v834, %v835
      %v837 = vsel %vm778, %v810, 0.0
      %v838 = vadd.f32 %v836, %v837
      %v839 = vsel %vm778, %v811, 0.0
      %v840 = vadd.f32 %v838, %v839
      %v841 = vsel %vm778, %v812, 0.0
      %v842 = vadd.f32 %v840, %v841
      %v843 = vsel %vm778, %v813, 0.0
      %v844 = vadd.f32 %v842, %v843
      %845 = vadd.xlane.f32.xlu0 %v844
      %v846 = vpop.xlane.xlu0 %845
      %v847 = vrot.slane %v846, 4
      %v848 = vadd.f32 %v846, %v847
      %v849 = vrot.slane %v848, 2
      %v850 = vadd.f32 %v848, %v849
      %v851 = vrot.slane %v850, 1
      %v852 = vadd.f32 %v850, %v851
      %s853 = vtos %v852
      %v854 = vstv %s853
      %855 = vst [vmem:[#allocation6] sm:$0xff] %v854
    $region21: #{tpu_custom_call.1} parent=1 // pred_fallthru
      _
    // Predicated region
    $region22: #{tpu_custom_call.1} parent=1 // pred_check
      _
    $region23: #{tpu_custom_call.1} parent=1 // pred_check_branch
      %857 = sbr.rel (0) target = $region25
    $region24: #{tpu_custom_call.1} parent=1 // pred_region
      %s859 = ssub.s32 128, 128
      %860 = vsyncadd [#allocation7], %s859
      %s862 = sshll.u32 [#allocation6], 4
      %s863 = int_to_ptr.vmem [resolvable:$true] %s862
      %865 = dma.vmem_to_hbm [thread:$0]  %s863, 128, %s5, [#allocation7]
    $region25: #{tpu_custom_call.1} parent=1 // pred_fallthru
      _
    // Predicated region
    $region26: #{tpu_custom_call.1} parent=1 // pred_check
      _
    $region27: #{tpu_custom_call.1} parent=1 // pred_check_branch
      %867 = sbr.rel (0) target = $region29
    $region28: #{tpu_custom_call.1} parent=1 // pred_region
      %868 = dma.done [#allocation7], 128
    $region29: #{tpu_custom_call.1} parent=1 // pred_fallthru
      _
    %869 = vsyncpa [#allocation7], 1

</llo_original>
